<compile_context>
chip_gen: v7x
topology: tpu7x:2x2x1
jax: 0.10.0
libtpu: 0.0.40
codegen_flags: <defaults>
</compile_context>

<pallas_src>
import functools

import jax
import jax.numpy as jnp
from jax.experimental import pallas as pl
from jax.experimental.pallas import tpu as pltpu


def _round_up(v: int, m: int) -> int:
    return (v + m - 1) // m * m


@functools.lru_cache(maxsize=None)
def _vmem_capacity_bytes() -> int:
    """Physical VMEM per TensorCore; falls back to the smallest generation (v7x)."""
    try:
        info = pltpu.get_tpu_info()
        return int(info.vmem_capacity_bytes)
    except Exception:
        return 64 << 20


def _make_linear_kernel(has_bias: bool, acc_in_output: bool):
    """Kernel computing o = x @ w (+ bias) with a K-last reduction grid."""

    def kernel(*refs):
        idx = 0
        x_ref = refs[idx]; idx += 1          # (TM, TK)
        w_ref = refs[idx]; idx += 1          # (TK, TN)  weight already (K, N)
        b_ref = None
        if has_bias:
            b_ref = refs[idx]; idx += 1      # (1, TN)
        o_ref = refs[idx]; idx += 1          # (TM, TN)  resident across K
        acc_ref = o_ref if acc_in_output else refs[idx]

        k = pl.program_id(2)

        @pl.when(k == 0)
        def _():
            acc_ref[...] = jnp.zeros_like(acc_ref)

        acc_ref[...] += jnp.dot(
            x_ref[...], w_ref[...], preferred_element_type=jnp.float32
        )

        @pl.when(k == pl.num_programs(2) - 1)
        def _():
            acc = acc_ref[...]
            if has_bias:
                acc = acc + b_ref[...].astype(jnp.float32)
            o_ref[...] = acc.astype(o_ref.dtype)

    return kernel


@jax.jit
def poincare_ball_linear(x, weight, bias=None):
    """Equivalent of PoincareBallLinear.forward (== F.linear, see note above).

    x:      (..., in_features)
    weight: (out_features, in_features)
    bias:   (out_features,) or None
    returns (..., out_features)
    """
    out_features, in_features = weight.shape
    lead_shape = x.shape[:-1]
    dtype = x.dtype
    itemsize = jnp.dtype(dtype).itemsize

    weight = weight.astype(dtype)
    has_bias = bias is not None
    if has_bias:
        bias = bias.astype(dtype)

    x2 = x.reshape(-1, in_features)
    m = x2.shape[0]

    # ---- generation-aware tile caps / VMEM budget --------------------------
    big_vmem = _vmem_capacity_bytes() >= (100 << 20)   # v5e/v6e: 128 MiB parts
    tm_cap, tn_cap = 512, 512
    tk_cap = 2048 if big_vmem else 1024                # v7x: 64 MiB physical
    vmem_clamp = (96 << 20) if big_vmem else (56 << 20)

    np_ = _round_up(out_features, 128)                 # lane-dense output
    tm = min(tm_cap, _round_up(m, 8))
    tn = min(tn_cap, np_)

    if in_features <= tk_cap:
        tk, kp = in_features, in_features              # single full-K block, no pad
    else:
        tk = tk_cap
        kp = _round_up(in_features, tk)                # zero-padded reduction

    grid_m, grid_n = pl.cdiv(m, tm), pl.cdiv(np_, tn)
    # v7x megacore: make sure the parallel axes have >= 2 blocks when possible.
    if grid_m * grid_n == 1:
        if tn > 128:
            tn = _round_up(tn // 2, 128)
        elif tm > 8:
            tm = _round_up(tm // 2, 8)
        grid_m, grid_n = pl.cdiv(m, tm), pl.cdiv(np_, tn)
    grid_k = kp // tk
    grid = (grid_m, grid_n, grid_k)

    # ---- one-time relayouts (wrapper side) ---------------------------------
    # K must stay zero-padded (correct reduction); N padded for lane-dense
    # stores; M is NOT padded (partial final M block, rows beyond m never exist
    # in the output).  Weight is transposed to (K, N) once so the kernel uses
    # the canonical contraction — no in-kernel transpose.
    xp = x2 if kp == in_features else jnp.pad(x2, ((0, 0), (0, kp - in_features)))
    wt = weight.T
    if kp != in_features or np_ != out_features:
        wt = jnp.pad(wt, ((0, kp - in_features), (0, np_ - out_features)))

    inputs = [xp, wt]
    deep = grid_k >= 2  # deeper buffering only matters when streaming K panels
    if deep:
        x_spec = pl.BlockSpec((tm, tk), lambda i, j, k: (i, k),
                              pipeline_mode=pl.Buffered(3))
        w_spec = pl.BlockSpec((tk, tn), lambda i, j, k: (k, j),
                              pipeline_mode=pl.Buffered(3))
    else:
        x_spec = pl.BlockSpec((tm, tk), lambda i, j, k: (i, k))
        w_spec = pl.BlockSpec((tk, tn), lambda i, j, k: (k, j))
    in_specs = [x_spec, w_spec]

    if has_bias:
        bp = bias if np_ == out_features else jnp.pad(bias, (0, np_ - out_features))
        inputs.append(bp.reshape(1, np_))
        in_specs.append(pl.BlockSpec((1, tn), lambda i, j, k: (0, j)))

    # f32 outputs: accumulate directly into the resident output block.
    acc_in_output = dtype == jnp.float32
    scratch_shapes = () if acc_in_output else (pltpu.VMEM((tm, tn), jnp.float32),)

    # ---- VMEM budget -------------------------------------------------------
    nbuf = 3 if deep else 2
    tile_bytes = (
        nbuf * tm * tk * itemsize          # x tiles
        + nbuf * tk * tn * itemsize        # weight tiles
        + 2 * tm * tn * itemsize           # output tiles
        + (2 * tn * itemsize if has_bias else 0)
        + (0 if acc_in_output else tm * tn * 4)
    )
    vmem_limit = int(min(max(tile_bytes + (4 << 20), 16 << 20), vmem_clamp))

    cost = pl.CostEstimate(
        flops=2 * m * np_ * kp,
        transcendentals=0,
        bytes_accessed=(m * kp + kp * np_ + m * np_) * itemsize,
    )

    out = pl.pallas_call(
        _make_linear_kernel(has_bias, acc_in_output),
        out_shape=jax.ShapeDtypeStruct((m, np_), dtype),
        grid_spec=pltpu.PrefetchScalarGridSpec(
            num_scalar_prefetch=0,
            grid=grid,
            in_specs=in_specs,
            out_specs=pl.BlockSpec((tm, tn), lambda i, j, k: (i, j)),
            scratch_shapes=scratch_shapes,
        ),
        compiler_params=pltpu.CompilerParams(
            dimension_semantics=("parallel", "parallel", "arbitrary"),
            vmem_limit_bytes=vmem_limit,
        ),
        cost_estimate=cost,
    )(*inputs)

    out = out[:, :out_features]
    return out.reshape(*lead_shape, out_features)


if __name__ == "__main__":
    # Deterministic parameters matching the module's __init__:
    #   weight = randn(out_features, in_features) * 0.1, bias = zeros(out_features)
    in_features = 32
    out_features = 32
    batch, seq = 2, 8

    key = jax.random.PRNGKey(0)
    k_w, k_x = jax.random.split(key)
    weight = jax.random.normal(k_w, (out_features, in_features), jnp.float32) * 0.1
    bias = jnp.zeros((out_features,), jnp.float32)
    x = jax.random.normal(k_x, (batch, seq, in_features), jnp.float32)

    y = poincare_ball_linear(x, weight, bias)
    y = jax.block_until_ready(y)

    # Reference (same semantics as the module: the hyperbolic branch is dead
    # code, forward == F.linear).
    y_ref = jnp.dot(x, weight.T, precision=jax.lax.Precision.HIGHEST) + bias
    assert y.shape == (batch, seq, out_features)
    assert jnp.allclose(y, y_ref, atol=1e-4, rtol=1e-4)

    # Also exercise the bias=None kernel variant.
    y2 = jax.block_until_ready(poincare_ball_linear(x, weight, None))
    y2_ref = jnp.dot(x, weight.T, precision=jax.lax.Precision.HIGHEST)
    assert jnp.allclose(y2, y2_ref, atol=1e-4, rtol=1e-4)

    print("KERNEL_OK")
</pallas_src>

<mosaic_0001>
module attributes {stable_mosaic.version = 11 : i64} {
  func.func @kernel(%arg0: i32, %arg1: i32, %arg2: i32, %arg3: memref<8x32xf32, #tpu.memory_space<vmem>>, %arg4: memref<32x128xf32, #tpu.memory_space<vmem>>, %arg5: memref<1x128xf32, #tpu.memory_space<vmem>>, %arg6: memref<8x128xf32, #tpu.memory_space<vmem>>) attributes {dimension_semantics = [#tpu.dimension_semantics<parallel>, #tpu.dimension_semantics<parallel>, #tpu.dimension_semantics<arbitrary>], iteration_bounds = array<i64: 2, 1, 1>, scalar_prefetch = 0 : i64, scratch_operands = 0 : i64, tpu.core_type = #tpu.core_type<tc>, window_params = [{transform_indices = @transform_0, window_bounds = array<i64: 8, 32>}, {transform_indices = @transform_1, window_bounds = array<i64: 32, 128>}, {transform_indices = @transform_2, window_bounds = array<i64: 1, 128>}, {transform_indices = @transform_3, window_bounds = array<i64: 8, 128>}]} {
    %c0_i32 = arith.constant 0 : i32
    %0 = arith.cmpi eq, %arg2, %c0_i32 : i32
    %1 = arith.extui %0 : i1 to i32
    %c0_i32_0 = arith.constant 0 : i32
    %2 = arith.cmpi ne, %1, %c0_i32_0 : i32
    scf.if %2 {
      %cst_10 = arith.constant 0.000000e+00 : f32
      %12 = vector.broadcast %cst_10 : f32 to vector<8x128xf32>
      %c0_11 = arith.constant 0 : index
      %c0_12 = arith.constant 0 : index
      %13 = vector.load %arg6[%c0_11, %c0_12] : memref<8x128xf32, #tpu.memory_space<vmem>>, vector<8x128xf32>
      tpu.vector_store %arg6[%c0_11, %c0_12], %12 {strides = array<i32>} : memref<8x128xf32, #tpu.memory_space<vmem>>, vector<8x128xf32>,
    } else {
    }
    %c0 = arith.constant 0 : index
    %c0_1 = arith.constant 0 : index
    %3 = vector.load %arg6[%c0, %c0_1] : memref<8x128xf32, #tpu.memory_space<vmem>>, vector<8x128xf32>
    %c0_2 = arith.constant 0 : index
    %c0_3 = arith.constant 0 : index
    %4 = vector.load %arg3[%c0_2, %c0_3] : memref<8x32xf32, #tpu.memory_space<vmem>>, vector<8x32xf32>
    %c0_4 = arith.constant 0 : index
    %c0_5 = arith.constant 0 : index
    %5 = vector.load %arg4[%c0_4, %c0_5] : memref<32x128xf32, #tpu.memory_space<vmem>>, vector<32x128xf32>
    %cst = arith.constant dense<0.000000e+00> : vector<8x128xf32>
    %6 = tpu.matmul %4, %5, %cst {dimension_numbers = #tpu.dot_dimension_numbers<[1], [0], [0], [1], [0, 0, 1, 1], [], []>} : vector<8x32xf32>, vector<32x128xf32>, vector<8x128xf32> -> vector<8x128xf32>
    %7 = arith.addf %3, %6 : vector<8x128xf32>
    %c0_6 = arith.constant 0 : index
    %c0_7 = arith.constant 0 : index
    %8 = vector.load %arg6[%c0_6, %c0_7] : memref<8x128xf32, #tpu.memory_space<vmem>>, vector<8x128xf32>
    tpu.vector_store %arg6[%c0_6, %c0_7], %7 {strides = array<i32>} : memref<8x128xf32, #tpu.memory_space<vmem>>, vector<8x128xf32>,
    %c0_i32_8 = arith.constant 0 : i32
    %9 = arith.cmpi eq, %arg2, %c0_i32_8 : i32
    %10 = arith.extui %9 : i1 to i32
    %c0_i32_9 = arith.constant 0 : i32
    %11 = arith.cmpi ne, %10, %c0_i32_9 : i32
    scf.if %11 {
      %c0_10 = arith.constant 0 : index
      %c0_11 = arith.constant 0 : index
      %12 = vector.load %arg6[%c0_10, %c0_11] : memref<8x128xf32, #tpu.memory_space<vmem>>, vector<8x128xf32>
      %c0_12 = arith.constant 0 : index
      %c0_13 = arith.constant 0 : index
      %13 = vector.load %arg5[%c0_12, %c0_13] : memref<1x128xf32, #tpu.memory_space<vmem>>, vector<1x128xf32>
      %14 = vector.broadcast %13 : vector<1x128xf32> to vector<8x128xf32>
      %15 = arith.addf %12, %14 : vector<8x128xf32>
      %c0_14 = arith.constant 0 : index
      %c0_15 = arith.constant 0 : index
      %16 = vector.load %arg6[%c0_14, %c0_15] : memref<8x128xf32, #tpu.memory_space<vmem>>, vector<8x128xf32>
      tpu.vector_store %arg6[%c0_14, %c0_15], %15 {strides = array<i32>} : memref<8x128xf32, #tpu.memory_space<vmem>>, vector<8x128xf32>,
    } else {
    }
    return
  }
  func.func @transform_0(%arg0: i32, %arg1: i32, %arg2: i32) -> (i32, i32) {
    %c0_i32 = arith.constant 0 : i32
    return %arg0, %arg2 : i32, i32
  }
  func.func @transform_1(%arg0: i32, %arg1: i32, %arg2: i32) -> (i32, i32) {
    %c0_i32 = arith.constant 0 : i32
    return %arg2, %arg1 : i32, i32
  }
  func.func @transform_2(%arg0: i32, %arg1: i32, %arg2: i32) -> (i32, i32) {
    %c0_i32 = arith.constant 0 : i32
    %c0_i32_0 = arith.constant 0 : i32
    return %c0_i32, %arg1 : i32, i32
  }
  func.func @transform_3(%arg0: i32, %arg1: i32, %arg2: i32) -> (i32, i32) {
    %c0_i32 = arith.constant 0 : i32
    return %arg0, %arg1 : i32, i32
  }
}

</mosaic_0001>

<llo_original>
// kernel: poincare_ball_linear.1
$region0: #{poincare_ball_linear.1}
  #allocation0 [shape = 'u32[]', space=smem, size = 0x4, offset = 0x4, fixed_abs, tag = 'smem constant byte address 0x4 - core index']
  #allocation1 [shape = 'u32[144,128]{1,0:T(1,128)}', space=vmem, size = 0x12000, scoped, tag = 'internal scratch']
  %s0 = inlined_call_operand.vmem [shape: f32[16,32], index: 0, kind: input, shape index: {}]
  %s1 = inlined_call_operand.vmem [shape: f32[32,128], index: 1, kind: input, shape index: {}]
  %s2 = inlined_call_operand.vmem [shape: f32[1,128], index: 2, kind: input, shape index: {}]
  %s3 = inlined_call_operand.vmem [shape: f32[16,128], index: 3, kind: output, shape index: {}]
  %s4 = sld [smem:[#allocation0]]
  $region53: #{poincare_ball_linear.1} parent=0
    _
  %s6 = ssub.s32 1, %s4
  %s7 = scalar_select 0, %s6, %s4
  loop: start=0, step=1, limit=4
  $region2: #{poincare_ball_linear.1} parent=0 // loop_pre_header
    _
  $region3: #{poincare_ball_linear.1} parent=0 // loop_header
    %s9 = sphi 0, %s13
    %p10 = scmp.ge.s32.totalorder %s9, 4
    %s16 = sphi 0, %s35
    %s17 = sphi 0, %s31
    %s18 = sphi 0, %s27
    %s19 = sphi 0, %s16
    %s20 = sphi 0, %s17
    %s21 = sphi 0, %s18
    %s22 = sphi 0, %s19
    %s23 = sphi 0, %s20
    %s24 = sphi 0, %s21
    %s40 = sphi 0, %s42
    %s43 = sphi 0, %s40
    %s44 = sphi 0, %s43
    %s60 = sphi 0, %s44
    %s68 = sphi 0, %s70
    %s71 = sphi 0, %s68
    %s72 = sphi 0, %s71
    %s88 = sphi 0, %s72
    %s94 = sphi 0, %s96
    %s97 = sphi 0, %s94
    %s98 = sphi 0, %s97
    %s114 = sphi 0, %s98
    %s122 = sphi 0, %s124
    %s125 = sphi 0, %s122
    %s126 = sphi 0, %s125
    %s142 = sphi 0, %s126
  $region4: #{poincare_ball_linear.1} parent=0 // loop_header_branch
    %12 = sbr.rel (%p10) target = $region8
  $region5: #{poincare_ball_linear.1} parent=0 // loop_body
    %s14 = ssub.s32 %s9, 1
    %s15 = ssub.s32 %s9, 2
    %s25 = sadd.s32 1, %s18
    %p26 = scmp.ge.s32.totalorder %s25, 1
    %s27 = scalar_select %p26, 0, %s25
    %s28 = sadd.s32 1, %s17
    %s29 = scalar_select %p26, %s28, %s17
    %p30 = scmp.ge.s32.totalorder %s29, 1
    %s31 = scalar_select %p30, 0, %s29
    %s32 = sadd.s32 1, %s16
    %s33 = scalar_select %p30, %s32, %s16
    %p34 = scmp.ge.s32.totalorder %s33, 2
    %s35 = scalar_select %p34, 0, %s33
    %s36 = ssub.s32 %s16, %s35
    %s37 = ssub.s32 %s18, %s27
    %s38 = sor.u32 %s36, %s37
    %p39 = scmp.eq.s32.totalorder %s38, 0
    %s41 = sadd.s32 %s40, 1
    %s42 = scalar_select %p39, %s40, %s41
    %p45 = pneg %p39
    %p46 = scmp.eq.s32.totalorder %s9, 1
    %p47 = por %p45, %p46
    %p48 = scmp.ne.s32.totalorder %s40, %s43
    %p49 = scmp.eq.s32.totalorder %s9, 0
    %p50 = por %p48, %p49
    %p51 = scmp.ne.s32.totalorder %s40, %s43
    %p52 = scmp.eq.s32.totalorder %s14, 1
    %p53 = por %p51, %p52
    %p54 = scmp.ne.s32.totalorder %s43, %s44
    %p55 = scmp.eq.s32.totalorder %s14, 0
    %p56 = por %p54, %p55
    %p57 = scmp.ne.s32.totalorder %s43, %s44
    %p58 = scmp.eq.s32.totalorder %s15, 1
    %p59 = por %p57, %p58
    %p61 = scmp.ne.s32.totalorder %s44, %s60
    %p62 = scmp.eq.s32.totalorder %s15, 0
    %p63 = por %p61, %p62
    %s64 = ssub.s32 %s18, %s27
    %s65 = ssub.s32 %s17, %s31
    %s66 = sor.u32 %s64, %s65
    %p67 = scmp.eq.s32.totalorder %s66, 0
    %s69 = sadd.s32 %s68, 1
    %s70 = scalar_select %p67, %s68, %s69
    %p73 = pneg %p67
    %p74 = scmp.eq.s32.totalorder %s9, 1
    %p75 = por %p73, %p74
    %p76 = scmp.ne.s32.totalorder %s68, %s71
    %p77 = scmp.eq.s32.totalorder %s9, 0
    %p78 = por %p76, %p77
    %p79 = scmp.ne.s32.totalorder %s68, %s71
    %p80 = scmp.eq.s32.totalorder %s14, 1
    %p81 = por %p79, %p80
    %p82 = scmp.ne.s32.totalorder %s71, %s72
    %p83 = scmp.eq.s32.totalorder %s14, 0
    %p84 = por %p82, %p83
    %p85 = scmp.ne.s32.totalorder %s71, %s72
    %p86 = scmp.eq.s32.totalorder %s15, 1
    %p87 = por %p85, %p86
    %p89 = scmp.ne.s32.totalorder %s72, %s88
    %p90 = scmp.eq.s32.totalorder %s15, 0
    %p91 = por %p89, %p90
    %s92 = ssub.s32 %s17, %s31
    %p93 = scmp.eq.s32.totalorder %s92, 0
    %s95 = sadd.s32 %s94, 1
    %s96 = scalar_select %p93, %s94, %s95
    %p99 = pneg %p93
    %p100 = scmp.eq.s32.totalorder %s9, 1
    %p101 = por %p99, %p100
    %p102 = scmp.ne.s32.totalorder %s94, %s97
    %p103 = scmp.eq.s32.totalorder %s9, 0
    %p104 = por %p102, %p103
    %p105 = scmp.ne.s32.totalorder %s94, %s97
    %p106 = scmp.eq.s32.totalorder %s14, 1
    %p107 = por %p105, %p106
    %p108 = scmp.ne.s32.totalorder %s97, %s98
    %p109 = scmp.eq.s32.totalorder %s14, 0
    %p110 = por %p108, %p109
    %p111 = scmp.ne.s32.totalorder %s97, %s98
    %p112 = scmp.eq.s32.totalorder %s15, 1
    %p113 = por %p111, %p112
    %p115 = scmp.ne.s32.totalorder %s98, %s114
    %p116 = scmp.eq.s32.totalorder %s15, 0
    %p117 = por %p115, %p116
    %s118 = ssub.s32 %s16, %s35
    %s119 = ssub.s32 %s17, %s31
    %s120 = sor.u32 %s118, %s119
    %p121 = scmp.eq.s32.totalorder %s120, 0
    %s123 = sadd.s32 %s122, 1
    %s124 = scalar_select %p121, %s122, %s123
    %p127 = pneg %p121
    %p128 = scmp.eq.s32.totalorder %s9, 1
    %p129 = por %p127, %p128
    %p130 = scmp.ne.s32.totalorder %s122, %s125
    %p131 = scmp.eq.s32.totalorder %s9, 0
    %p132 = por %p130, %p131
    %p133 = scmp.ne.s32.totalorder %s122, %s125
    %p134 = scmp.eq.s32.totalorder %s14, 1
    %p135 = por %p133, %p134
    %p136 = scmp.ne.s32.totalorder %s125, %s126
    %p137 = scmp.eq.s32.totalorder %s14, 0
    %p138 = por %p136, %p137
    %p139 = scmp.ne.s32.totalorder %s125, %s126
    %p140 = scmp.eq.s32.totalorder %s15, 1
    %p141 = por %p139, %p140
    %p143 = scmp.ne.s32.totalorder %s126, %s142
    %p144 = scmp.eq.s32.totalorder %s15, 0
    %p145 = por %p143, %p144
    %p146 = scmp.le.s32.totalorder 1, %s9
    %p147 = scmp.lt.s32.totalorder %s9, 3
    %p148 = pnand %p146, %p147
    %p149 = pneg %p148
    // Predicated region
    $region9: #{poincare_ball_linear.1} parent=5 // pred_check
      _
    $region10: #{poincare_ball_linear.1} parent=5 // pred_check_branch
      %151 = sbr.rel (%p148) target = $region12
    $region11: #{poincare_ball_linear.1} parent=5 // pred_region
      %s152 = ssub.s32 %s9, 1
      // Predicated region
      $region13: #{poincare_ball_linear.1} parent=11 // pred_check
        %p153 = pneg %p84
      $region14: #{poincare_ball_linear.1} parent=11 // pred_check_branch
        %155 = sbr.rel (%p153) target = $region16
      $region15: #{poincare_ball_linear.1} parent=11 // pred_region
        %s156 = smul.u32 4, %s21
        %p157 = scmp.lt.s32.totalorder %s156, 3
        %s158 = scalar_select %p157, %s156, 3
        %p159 = scmp.lt.s32.totalorder %s20, 0
        %s160 = scalar_select %p159, %s20, 0
        %s161 = sadd.s32 %s160, %s158
        %s162 = smul.addr %s161, 8
        %s163 = scalar_lea.vmem %s1, %s162
        %s164 = smul.u32 4, %s21
      $region16: #{poincare_ball_linear.1} parent=11 // pred_fallthru
        _
      // Predicated region
      $region17: #{poincare_ball_linear.1} parent=11 // pred_check
        %p165 = pneg %p110
      $region18: #{poincare_ball_linear.1} parent=11 // pred_check_branch
        %167 = sbr.rel (%p165) target = $region20
      $region19: #{poincare_ball_linear.1} parent=11 // pred_region
        %p168 = scmp.lt.s32.totalorder %s20, 0
        %s169 = scalar_select %p168, %s20, 0
        %s170 = scalar_lea.vmem %s2, %s169
      $region20: #{poincare_ball_linear.1} parent=11 // pred_fallthru
        _
    $region12: #{poincare_ball_linear.1} parent=5 // pred_fallthru
      _
    %p171 = scmp.lt.s32.totalorder %s9, 2
    // Predicated region
    $region21: #{poincare_ball_linear.1} parent=5 // pred_check
      %p172 = pneg %p171
    $region22: #{poincare_ball_linear.1} parent=5 // pred_check_branch
      %174 = sbr.rel (%p172) target = $region24
    $region23: #{poincare_ball_linear.1} parent=5 // pred_region
      // Predicated region
      $region25: #{poincare_ball_linear.1} parent=23 // pred_check
        %p175 = pneg %p50
      $region26: #{poincare_ball_linear.1} parent=23 // pred_check_branch
        %177 = sbr.rel (%p175) target = $region28
      $region27: #{poincare_ball_linear.1} parent=23 // pred_region
        %p178 = scmp.lt.s32.totalorder %s16, 1
        %s179 = scalar_select %p178, %s16, 1
        %p180 = scmp.lt.s32.totalorder %s18, 0
        %s181 = scalar_select %p180, %s18, 0
        %s182 = sadd.s32 %s181, %s179
        %s183 = smul.addr %s182, 8
        %s184 = scalar_lea.vmem %s0, %s183
      $region28: #{poincare_ball_linear.1} parent=23 // pred_fallthru
        _
    $region24: #{poincare_ball_linear.1} parent=5 // pred_fallthru
      _
    %p185 = scmp.le.s32.totalorder 1, %s9
    %p186 = scmp.lt.s32.totalorder %s9, 3
    %p187 = pnand %p185, %p186
    %p188 = pneg %p187
    // Predicated region
    $region29: #{poincare_ball_linear.1} parent=5 // pred_check
      _
    $region30: #{poincare_ball_linear.1} parent=5 // pred_check_branch
      %190 = sbr.rel (%p187) target = $region32
    $region31: #{poincare_ball_linear.1} parent=5 // pred_region
      %s191 = ssub.s32 %s9, 1
      %p192 = scmp.lt.s32.totalorder %s19, 1
      %s193 = scalar_select %p192, %s19, 1
      %p194 = scmp.lt.s32.totalorder %s21, 0
      %s195 = scalar_select %p194, %s21, 0
      %s196 = sadd.s32 %s195, %s193
      %s197 = smul.addr %s196, 8
      %s198 = scalar_lea.vmem %s0, %s197
      %p199 = pneg %p56
      %p200 = pneg %p53
      %s201 = smul.u32 4, %s21
      %p202 = scmp.lt.s32.totalorder %s201, 3
      %s203 = scalar_select %p202, %s201, 3
      %p204 = scmp.lt.s32.totalorder %s20, 0
      %s205 = scalar_select %p204, %s20, 0
      %s206 = sadd.s32 %s205, %s203
      %s207 = smul.addr %s206, 8
      %s208 = scalar_lea.vmem %s1, %s207
      %p209 = pneg %p84
      %p210 = pneg %p81
      %p211 = scmp.lt.s32.totalorder %s20, 0
      %s212 = scalar_select %p211, %s20, 0
      %s213 = scalar_lea.vmem %s2, %s212
      %p214 = pneg %p110
      %p215 = pneg %p107
      %p216 = pneg %p138
      %p217 = pneg %p135
      %p218 = scmp.lt.s32.totalorder %s19, 1
      %s219 = scalar_select %p218, %s19, 1
      %p220 = scmp.lt.s32.totalorder %s20, 0
      %s221 = scalar_select %p220, %s20, 0
      %s222 = sadd.s32 %s221, %s219
      %s223 = smul.addr %s222, 8
      %s224 = scalar_lea.vmem %s3, %s223
      %p225 = scmp.lt.s32.totalorder %s19, 1
      %s226 = scalar_select %p225, %s19, 1
      %p227 = scmp.lt.s32.totalorder %s21, 0
      %s228 = scalar_select %p227, %s21, 0
      %s229 = sadd.s32 %s228, %s226
      %s230 = smul.addr %s229, 8
      %s231 = scalar_lea.vmem %s0, %s230
      %s232 = smul.u32 4, %s21
      %p233 = scmp.lt.s32.totalorder %s232, 3
      %s234 = scalar_select %p233, %s232, 3
      %p235 = scmp.lt.s32.totalorder %s20, 0
      %s236 = scalar_select %p235, %s20, 0
      %s237 = sadd.s32 %s236, %s234
      %s238 = smul.addr %s237, 8
      %s239 = scalar_lea.vmem %s1, %s238
      %s240 = smul.u32 4, %s21
      %p241 = scmp.lt.s32.totalorder %s20, 0
      %s242 = scalar_select %p241, %s20, 0
      %s243 = scalar_lea.vmem %s2, %s242
      %p244 = scmp.lt.s32.totalorder %s19, 1
      %s245 = scalar_select %p244, %s19, 1
      %p246 = scmp.lt.s32.totalorder %s20, 0
      %s247 = scalar_select %p246, %s20, 0
      %s248 = sadd.s32 %s247, %s245
      %s249 = smul.addr %s248, 8
      %s250 = scalar_lea.vmem %s3, %s249
      %p251 = scmp.eq.s32.totalorder %s21, 0
      // Predicated region
      $region33: #{poincare_ball_linear.1} parent=31 // pred_check
        %p252 = pneg %p251
      $region34: #{poincare_ball_linear.1} parent=31 // pred_check_branch
        %254 = sbr.rel (%p252) target = $region36
      $region35: #{poincare_ball_linear.1} parent=31 // pred_region
        %255 = vst [vmem:[%s250] sm:$0xff] 0.0
      $region36: #{poincare_ball_linear.1} parent=31 // pred_fallthru
        _
      %v256 = vld [vmem:[%s250] sm:$0xff]
      %v257 = vld [vmem:[%s231] sm:$0xff]
      %v258 = vld [vmem:[%s239] sm:$0xff]
      %v259 = vld [vmem:[%s239 + $0x8] sm:$0xff]
      %v260 = vld [vmem:[%s239 + $0x10] sm:$0xff]
      %v261 = vld [vmem:[%s239 + $0x18] sm:$0xff]
      %vm262 = vcmask 261120
      %v264 = vsel %vm262, %v257, 0
      %266 = vmatprep.subr.mxu0 0.0
      %267 = vmatpush1.msra.mxu0 %v258
      %268 = vmatprep.subr.mxu0 0.0
      %269 = vmatpush1.msra.mxu0 %v259
      %270 = vmatprep.subr.mxu0 0.0
      %271 = vmatpush1.msra.mxu0 %v260
      %272 = vmatprep.subr.mxu0 0.0
      %273 = vmatpush1.msra.mxu0 %v261
      %274 = vmatprep.subr.mxu0 0.0
      %275 = vmatpush1.msra.mxu0 0.0
      %276 = vmatprep.subr.mxu0 0.0
      %277 = vmatpush1.msra.mxu0 0.0
      %278 = vmatprep.subr.mxu0 0.0
      %279 = vmatpush1.msra.mxu0 0.0
      %280 = vmatprep.subr.mxu0 0.0
      %281 = vmatpush1.msra.mxu0 0.0
      %282 = vmatprep.subr.mxu0 0.0
      %283 = vmatpush1.msra.mxu0 0.0
      %284 = vmatprep.subr.mxu0 0.0
      %285 = vmatpush1.msra.mxu0 0.0
      %286 = vmatprep.subr.mxu0 0.0
      %287 = vmatpush1.msra.mxu0 0.0
      %288 = vmatprep.subr.mxu0 0.0
      %289 = vmatpush1.msra.mxu0 0.0
      %290 = vmatprep.subr.mxu0 0.0
      %291 = vmatpush1.msra.mxu0 0.0
      %292 = vmatprep.subr.mxu0 0.0
      %293 = vmatpush1.msra.mxu0 0.0
      %294 = vmatprep.subr.mxu0 0.0
      %295 = vmatpush1.msra.mxu0 0.0
      %296 = vmatprep.subr.mxu0 0.0
      %297 = vmatpush1.msra.mxu0 0.0
      %298 = vmatprep.subr.mxu0 0.0
      %299 = vmatpush1.msra.mxu0 0.0
      %300 = vmatprep.subr.mxu0 0.0
      %301 = vmatpush1.msra.mxu0 0.0
      %302 = vmatprep.subr.mxu0 0.0
      %303 = vmatpush1.msra.mxu0 0.0
      %304 = vmatprep.subr.mxu0 0.0
      %305 = vmatpush1.msra.mxu0 0.0
      %306 = vmatprep.subr.mxu0 0.0
      %307 = vmatpush1.msra.mxu0 0.0
      %308 = vmatprep.subr.mxu0 0.0
      %309 = vmatpush1.msra.mxu0 0.0
      %310 = vmatprep.subr.mxu0 0.0
      %311 = vmatpush1.msra.mxu0 0.0
      %312 = vmatprep.subr.mxu0 0.0
      %313 = vmatpush1.msra.mxu0 0.0
      %314 = vmatprep.subr.mxu0 0.0
      %315 = vmatpush1.msra.mxu0 0.0
      %316 = vmatprep.subr.mxu0 0.0
      %317 = vmatpush1.msra.mxu0 0.0
      %318 = vmatprep.subr.mxu0 0.0
      %319 = vmatpush1.msra.mxu0 0.0
      %320 = vmatprep.subr.mxu0 0.0
      %321 = vmatpush1.msra.mxu0 0.0
      %322 = vmatprep.subr.mxu0 0.0
      %323 = vmatpush1.msra.mxu0 0.0
      %324 = vmatprep.subr.mxu0 0.0
      %325 = vmatpush1.msra.mxu0 0.0
      %326 = vmatprep.subr.mxu0 0.0
      %327 = vmatpush1.msra.mxu0 0.0
      %328 = vmatprep.subr.mxu0 0.0
      %329 = vmatpush1.msra.mxu0 0.0
      %330 = vmatprep.mubr.f32.mxu0 0.0
      %331 = vmatmul.mubr.f32.gmra.mrb[0].mxu0 %v264
      %v332 = vpop.f32.mrb[0].mxu0
      %v333 = vadd.f32 0.0, %v332
      %v334 = vpop.f32.mrb[0].mxu0
      %335 = vdwg.mxu0
      %v336 = vadd.f32 %v256, %v333
      %337 = vst [vmem:[%s250] sm:$0xff] %v336
      // Predicated region
      $region37: #{poincare_ball_linear.1} parent=31 // pred_check
        %p338 = pneg %p251
      $region38: #{poincare_ball_linear.1} parent=31 // pred_check_branch
        %340 = sbr.rel (%p338) target = $region40
      $region39: #{poincare_ball_linear.1} parent=31 // pred_region
        %v341 = vld [vmem:[%s250] sm:$0xff]
        %v342 = vld [vmem:[%s243] sm:$0x1]
        %v344 = vlaneseq
        %v345 = vshrl.u32 %v344, 7
        %v346 = vsub.s32 0, %v345
        %v347 = vrot.slane %v342, %v346
        %v349 = vadd.f32 %v341, %v347
        %350 = vst [vmem:[%s250] sm:$0xff] %v349
      $region40: #{poincare_ball_linear.1} parent=31 // pred_fallthru
        _
      %p351 = scmp.lt.s32.totalorder %s19, 1
      %s352 = scalar_select %p351, %s19, 1
      %p353 = scmp.lt.s32.totalorder %s20, 0
      %s354 = scalar_select %p353, %s20, 0
      %s355 = sadd.s32 %s354, %s352
      %s356 = smul.addr %s355, 8
      %s357 = scalar_lea.vmem %s3, %s356
      // Predicated region
      $region41: #{poincare_ball_linear.1} parent=31 // pred_check
        %p358 = pneg %p135
      $region42: #{poincare_ball_linear.1} parent=31 // pred_check_branch
        %360 = sbr.rel (%p358) target = $region44
      $region43: #{poincare_ball_linear.1} parent=31 // pred_region
        _
      $region44: #{poincare_ball_linear.1} parent=31 // pred_fallthru
        _
    $region32: #{poincare_ball_linear.1} parent=5 // pred_fallthru
      _
    %p361 = scmp.le.s32.totalorder 2, %s9
    // Predicated region
    $region45: #{poincare_ball_linear.1} parent=5 // pred_check
      %p362 = pneg %p361
    $region46: #{poincare_ball_linear.1} parent=5 // pred_check_branch
      %364 = sbr.rel (%p362) target = $region48
    $region47: #{poincare_ball_linear.1} parent=5 // pred_region
      %s365 = ssub.s32 %s9, 2
      // Predicated region
      $region49: #{poincare_ball_linear.1} parent=47 // pred_check
        %p366 = pneg %p141
      $region50: #{poincare_ball_linear.1} parent=47 // pred_check_branch
        %368 = sbr.rel (%p366) target = $region52
      $region51: #{poincare_ball_linear.1} parent=47 // pred_region
        %p369 = scmp.lt.s32.totalorder %s22, 1
        %s370 = scalar_select %p369, %s22, 1
        %p371 = scmp.lt.s32.totalorder %s23, 0
        %s372 = scalar_select %p371, %s23, 0
        %s373 = sadd.s32 %s372, %s370
        %s374 = smul.addr %s373, 8
        %s375 = scalar_lea.vmem %s3, %s374
      $region52: #{poincare_ball_linear.1} parent=47 // pred_fallthru
        _
    $region48: #{poincare_ball_linear.1} parent=5 // pred_fallthru
      _
  $region6: #{poincare_ball_linear.1} parent=0 // loop_footer
    %s13 = sadd.s32 1, %s9
  $region7: #{poincare_ball_linear.1} parent=0 // loop_footer_branch
    %8 = sbr.rel target = $region3
  $region8: #{poincare_ball_linear.1} parent=0 // loop_exit
    _

</llo_original>
